<compile_context>
chip_gen: v7x
topology: tpu7x:2x2x1
jax: 0.10.0
libtpu: 0.0.40
codegen_flags: <defaults>
</compile_context>

<pallas_src>
import functools

import numpy as np
import jax
import jax.numpy as jnp
from jax import lax
from jax.experimental import pallas as pl
from jax.experimental.pallas import tpu as pltpu


LANE = 128


def _round_up(x, m):
    return (x + m - 1) // m * m


# ---------------------------- Pallas kernels ----------------------------

def matmul_bn_prelu_kernel(x_ref, w_ref, s_ref, b_ref, a_ref, o_ref):
    # o = PReLU(BN(x @ w)) for one (TILE_M, K) row tile (bf16 in, f32 out).
    y = jnp.dot(x_ref[...], w_ref[...], preferred_element_type=jnp.float32)
    y = y * s_ref[...] + b_ref[...]
    o_ref[...] = jnp.where(y > 0, y, a_ref[...] * y)


def fused_loc_sur_reduce_kernel(
        lp_ref, sp_ref,                 # im2col patches (1, THW, 9C) bf16
        wl_ref, ws_ref,                 # F_loc / F_sur weights (9C, Cp) bf16
        wrl_ref, wrs_ref,               # reduce weight halves (Cp, Cp) bf16
        lsc_ref, lbi_ref, lal_ref,      # F_loc BN scale/bias + PReLU alpha
        jls_ref, jlb_ref, jla_ref,      # joi BN/PReLU, loc half
        jss_ref, jsb_ref, jsa_ref,      # joi BN/PReLU, sur half
        rsc_ref, rbi_ref, ral_ref,      # reduce BN scale/bias + PReLU alpha
        red_ref, pool_ref,              # outputs: red tile, per-image channel sums
        *, hw_valid, tile_hw):
    hw = pl.program_id(1)

    @pl.when(hw == 0)
    def _():
        pool_ref[...] = jnp.zeros_like(pool_ref)

    lp = lp_ref[0]                      # (THW, 9C)
    sp = sp_ref[0]

    # F_loc: conv -> BN -> PReLU, then joi BN/PReLU (first C channels).
    loc = jnp.dot(lp, wl_ref[...], preferred_element_type=jnp.float32)
    loc = loc * lsc_ref[...] + lbi_ref[...]
    loc = jnp.where(loc > 0, loc, lal_ref[...] * loc)
    loc = loc * jls_ref[...] + jlb_ref[...]
    loc = jnp.where(loc > 0, loc, jla_ref[...] * loc)

    # F_sur: dilated conv only, then joi BN/PReLU (second C channels).
    sur = jnp.dot(sp, ws_ref[...], preferred_element_type=jnp.float32)
    sur = sur * jss_ref[...] + jsb_ref[...]
    sur = jnp.where(sur > 0, sur, jsa_ref[...] * sur)

    # reduce 1x1 conv over the (virtual) concat [loc, sur] + BN + PReLU.
    red = (jnp.dot(loc.astype(jnp.bfloat16), wrl_ref[...],
                   preferred_element_type=jnp.float32)
           + jnp.dot(sur.astype(jnp.bfloat16), wrs_ref[...],
                     preferred_element_type=jnp.float32))
    red = red * rsc_ref[...] + rbi_ref[...]
    red = jnp.where(red > 0, red, ral_ref[...] * red)

    if hw_valid % tile_hw != 0:
        # zero rows past the true H*W extent so the SE pool stays exact.
        row = lax.broadcasted_iota(jnp.int32, (tile_hw, 1), 0) + hw * tile_hw
        red = jnp.where(row < hw_valid, red, 0.0)

    red_ref[...] = red[None, :, :]
    pool_ref[...] += jnp.sum(red, axis=0).reshape(1, 1, -1)


def rescale_kernel(x_ref, s_ref, o_ref):
    # Channel-wise SE rescale: o = x * s (s broadcast over the row tile).
    o_ref[...] = x_ref[...] * s_ref[...]


# ---------------------------- wrappers / glue ----------------------------

def extract_patches(x, k, stride, padding, dilation):
    # x: (N, H, W, C) -> (N, Ho, Wo, k*k*C), matching PyTorch Conv2d windowing.
    N, H, W, C = x.shape
    xp = jnp.pad(x, ((0, 0), (padding, padding), (padding, padding), (0, 0)))
    Ho = (H + 2 * padding - dilation * (k - 1) - 1) // stride + 1
    Wo = (W + 2 * padding - dilation * (k - 1) - 1) // stride + 1
    cols = []
    for i in range(k):
        for j in range(k):
            sl = xp[:, i * dilation:i * dilation + (Ho - 1) * stride + 1:stride,
                       j * dilation:j * dilation + (Wo - 1) * stride + 1:stride, :]
            cols.append(sl)
    return jnp.concatenate(cols, axis=-1), Ho, Wo


def conv_w_to_mat(w, cout_pad):
    # PyTorch (Cout, Cin, kh, kw) -> (kh*kw*Cin, cout_pad), zero-padded cols.
    Cout, Cin, kh, kw = w.shape
    m = jnp.transpose(w, (2, 3, 1, 0)).reshape(kh * kw * Cin, Cout)
    return jnp.pad(m, ((0, 0), (0, cout_pad - Cout)))


def bn_fold(gamma, beta, mean, var, eps=1e-3):
    s = gamma / jnp.sqrt(var + eps)
    return s, beta - mean * s


def pad_row(v, cp, fill=0.0):
    v = v.astype(jnp.float32)
    return jnp.pad(v, (0, cp - v.shape[0]), constant_values=fill).reshape(1, cp)


def context_guided_block_down(x_nchw, p, *, tile_m=512, tile_hw=512):
    x = jnp.transpose(x_nchw, (0, 2, 3, 1)).astype(jnp.float32)   # NHWC
    N = x.shape[0]
    C = p['conv1_w'].shape[0]                                     # nOut
    Cp = _round_up(C, LANE)

    # ---------------- stage A: conv1x1 = 3x3 stride-2 conv + BN + PReLU ----
    patches1, Ho, Wo = extract_patches(x, 3, 2, 1, 1)
    K1 = patches1.shape[-1]
    M = N * Ho * Wo
    TM = min(tile_m, _round_up(M, 8))
    Mp = _round_up(M, TM)
    p1 = patches1.reshape(M, K1).astype(jnp.bfloat16)
    if Mp != M:
        p1 = jnp.pad(p1, ((0, Mp - M), (0, 0)))
    w1 = conv_w_to_mat(p['conv1_w'], Cp).astype(jnp.bfloat16)
    s1, b1 = bn_fold(p['bn1_g'], p['bn1_b'], p['bn1_m'], p['bn1_v'])

    vec_a = pl.BlockSpec((1, Cp), lambda i: (0, 0))
    out1 = pl.pallas_call(
        matmul_bn_prelu_kernel,
        out_shape=jax.ShapeDtypeStruct((Mp, Cp), jnp.float32),
        grid=(Mp // TM,),
        in_specs=[pl.BlockSpec((TM, K1), lambda i: (i, 0)),
                  pl.BlockSpec((K1, Cp), lambda i: (0, 0)),
                  vec_a, vec_a, vec_a],
        out_specs=pl.BlockSpec((TM, Cp), lambda i: (i, 0)),
        compiler_params=pltpu.CompilerParams(
            dimension_semantics=("parallel",)),
    )(p1, w1, pad_row(s1, Cp), pad_row(b1, Cp), pad_row(p['prelu1_a'], Cp, 1.0))

    out1_nhwc = out1[:M, :C].reshape(N, Ho, Wo, C)

    # -------- stage B: fused F_loc + F_sur + joi BN/PReLU + reduce + pool ---
    loc_p, _, _ = extract_patches(out1_nhwc, 3, 1, 1, 1)          # (N,Ho,Wo,9C)
    sur_p, _, _ = extract_patches(out1_nhwc, 3, 1, 2, 2)
    K2 = loc_p.shape[-1]
    HW = Ho * Wo
    THW = min(tile_hw, _round_up(HW, 8))
    HWp = _round_up(HW, THW)
    lp = loc_p.reshape(N, HW, K2).astype(jnp.bfloat16)
    sp = sur_p.reshape(N, HW, K2).astype(jnp.bfloat16)
    if HWp != HW:
        lp = jnp.pad(lp, ((0, 0), (0, HWp - HW), (0, 0)))
        sp = jnp.pad(sp, ((0, 0), (0, HWp - HW), (0, 0)))

    wl = conv_w_to_mat(p['loc_w'], Cp).astype(jnp.bfloat16)
    ws = conv_w_to_mat(p['sur_w'], Cp).astype(jnp.bfloat16)
    red_mat = conv_w_to_mat(p['red_w'], Cp)                       # (2C, Cp)
    wr_loc = jnp.zeros((Cp, Cp), jnp.float32).at[:C].set(red_mat[:C])
    wr_sur = jnp.zeros((Cp, Cp), jnp.float32).at[:C].set(red_mat[C:])
    wr_loc = wr_loc.astype(jnp.bfloat16)
    wr_sur = wr_sur.astype(jnp.bfloat16)

    lsc, lbi = bn_fold(p['loc_bn_g'], p['loc_bn_b'], p['loc_bn_m'], p['loc_bn_v'])
    sj, bj = bn_fold(p['joi_bn_g'], p['joi_bn_b'], p['joi_bn_m'], p['joi_bn_v'])
    aj = p['joi_prelu_a']
    rsc, rbi = bn_fold(p['red_bn_g'], p['red_bn_b'], p['red_bn_m'], p['red_bn_v'])

    vec_b = pl.BlockSpec((1, Cp), lambda n, h: (0, 0))
    patch_spec = pl.BlockSpec((1, THW, K2), lambda n, h: (n, h, 0))
    kern = functools.partial(fused_loc_sur_reduce_kernel,
                             hw_valid=HW, tile_hw=THW)
    red, pool = pl.pallas_call(
        kern,
        out_shape=(jax.ShapeDtypeStruct((N, HWp, Cp), jnp.float32),
                   jax.ShapeDtypeStruct((N, 1, Cp), jnp.float32)),
        grid=(N, HWp // THW),
        in_specs=[patch_spec, patch_spec,
                  pl.BlockSpec((K2, Cp), lambda n, h: (0, 0)),
                  pl.BlockSpec((K2, Cp), lambda n, h: (0, 0)),
                  pl.BlockSpec((Cp, Cp), lambda n, h: (0, 0)),
                  pl.BlockSpec((Cp, Cp), lambda n, h: (0, 0))]
                 + [vec_b] * 12,
        out_specs=(pl.BlockSpec((1, THW, Cp), lambda n, h: (n, h, 0)),
                   pl.BlockSpec((1, 1, Cp), lambda n, h: (n, 0, 0))),
        compiler_params=pltpu.CompilerParams(
            dimension_semantics=("parallel", "arbitrary")),
    )(lp, sp, wl, ws, wr_loc, wr_sur,
      pad_row(lsc, Cp), pad_row(lbi, Cp), pad_row(p['loc_prelu_a'], Cp, 1.0),
      pad_row(sj[:C], Cp), pad_row(bj[:C], Cp), pad_row(aj[:C], Cp, 1.0),
      pad_row(sj[C:], Cp), pad_row(bj[C:], Cp), pad_row(aj[C:], Cp, 1.0),
      pad_row(rsc, Cp), pad_row(rbi, Cp), pad_row(p['red_prelu_a'], Cp, 1.0))

    # -------- stage C: SE attention (tiny fcs in JAX, streaming rescale) ----
    mean = pool[:, 0, :C] / float(HW)                             # (N, C)
    h = jnp.maximum(mean @ jnp.transpose(p['fc1_w']), 0.0)
    scale = jax.nn.sigmoid(h @ jnp.transpose(p['fc2_w']))         # (N, C)
    scale = jnp.pad(scale, ((0, 0), (0, Cp - C))).reshape(N, 1, Cp)

    out = pl.pallas_call(
        rescale_kernel,
        out_shape=jax.ShapeDtypeStruct((N, HWp, Cp), jnp.float32),
        grid=(N, HWp // THW),
        in_specs=[pl.BlockSpec((1, THW, Cp), lambda n, h: (n, h, 0)),
                  pl.BlockSpec((1, 1, Cp), lambda n, h: (n, 0, 0))],
        out_specs=pl.BlockSpec((1, THW, Cp), lambda n, h: (n, h, 0)),
        compiler_params=pltpu.CompilerParams(
            dimension_semantics=("parallel", "parallel")),
    )(red, scale)

    out = out[:, :HW, :C].reshape(N, Ho, Wo, C)
    return jnp.transpose(out, (0, 3, 1, 2))                       # NCHW


# ------------------------- pure-JAX reference ----------------------------

def reference(x_nchw, p):
    x = jnp.transpose(x_nchw, (0, 2, 3, 1)).astype(jnp.float32)

    def conv(x, w, stride=1, dilation=1, padding=0):
        return lax.conv_general_dilated(
            x, jnp.transpose(w, (2, 3, 1, 0)),
            window_strides=(stride, stride),
            padding=[(padding, padding)] * 2,
            rhs_dilation=(dilation, dilation),
            dimension_numbers=('NHWC', 'HWIO', 'NHWC'))

    def bn(x, g, b, m, v):
        s = g / jnp.sqrt(v + 1e-3)
        return x * s + (b - m * s)

    def prelu(x, a):
        return jnp.where(x > 0, x, a * x)

    o = prelu(bn(conv(x, p['conv1_w'], 2, 1, 1),
                 p['bn1_g'], p['bn1_b'], p['bn1_m'], p['bn1_v']), p['prelu1_a'])
    loc = prelu(bn(conv(o, p['loc_w'], 1, 1, 1),
                   p['loc_bn_g'], p['loc_bn_b'], p['loc_bn_m'], p['loc_bn_v']),
                p['loc_prelu_a'])
    sur = conv(o, p['sur_w'], 1, 2, 2)
    joi = jnp.concatenate([loc, sur], axis=-1)
    joi = prelu(bn(joi, p['joi_bn_g'], p['joi_bn_b'], p['joi_bn_m'], p['joi_bn_v']),
                p['joi_prelu_a'])
    red = prelu(bn(conv(joi, p['red_w'], 1, 1, 0),
                   p['red_bn_g'], p['red_bn_b'], p['red_bn_m'], p['red_bn_v']),
                p['red_prelu_a'])
    y = jnp.mean(red, axis=(1, 2))
    h = jnp.maximum(y @ jnp.transpose(p['fc1_w']), 0.0)
    s = jax.nn.sigmoid(h @ jnp.transpose(p['fc2_w']))
    out = red * s[:, None, None, :]
    return jnp.transpose(out, (0, 3, 1, 2))


# ------------------------------ params ------------------------------------

def init_params(key, nIn, nOut, reduction):
    keys = iter(jax.random.split(key, 32))
    nrm = lambda shape, scale=0.1: scale * jax.random.normal(next(keys), shape,
                                                             jnp.float32)

    def bn_params(c):
        g = 1.0 + nrm((c,))
        b = nrm((c,))
        m = nrm((c,))
        v = 1.0 + 0.1 * jnp.abs(jax.random.normal(next(keys), (c,), jnp.float32))
        return g, b, m, v

    Cr = nOut // reduction
    p = {}
    p['conv1_w'] = nrm((nOut, nIn, 3, 3))
    p['bn1_g'], p['bn1_b'], p['bn1_m'], p['bn1_v'] = bn_params(nOut)
    p['prelu1_a'] = jnp.full((nOut,), 0.25, jnp.float32)
    p['loc_w'] = nrm((nOut, nOut, 3, 3))
    p['loc_bn_g'], p['loc_bn_b'], p['loc_bn_m'], p['loc_bn_v'] = bn_params(nOut)
    p['loc_prelu_a'] = jnp.full((nOut,), 0.25, jnp.float32)
    p['sur_w'] = nrm((nOut, nOut, 3, 3))
    p['joi_bn_g'], p['joi_bn_b'], p['joi_bn_m'], p['joi_bn_v'] = bn_params(2 * nOut)
    p['joi_prelu_a'] = jnp.full((2 * nOut,), 0.25, jnp.float32)
    p['red_w'] = nrm((nOut, 2 * nOut, 1, 1))
    p['red_bn_g'], p['red_bn_b'], p['red_bn_m'], p['red_bn_v'] = bn_params(nOut)
    p['red_prelu_a'] = jnp.full((nOut,), 0.25, jnp.float32)
    p['fc1_w'] = nrm((Cr, nOut), 0.2)
    p['fc2_w'] = nrm((nOut, Cr), 0.2)
    return p


if __name__ == "__main__":
    nIn, nOut, reduction = 8, 32, 4
    key = jax.random.PRNGKey(0)
    kx, kp = jax.random.split(key)
    x = jax.random.normal(kx, (2, nIn, 16, 16), jnp.float32)
    params = init_params(kp, nIn, nOut, reduction)

    out = context_guided_block_down(x, params)
    out = jax.block_until_ready(out)
    assert out.shape == (2, nOut, 8, 8), out.shape

    ref = reference(x, params)
    # bf16 MXU operands with f32 accumulation -> compare at bf16-level tolerance.
    np.testing.assert_allclose(np.asarray(out), np.asarray(ref),
                               atol=2e-2, rtol=2e-2)
    print("KERNEL_OK")
</pallas_src>

<mosaic_0001>
module attributes {stable_mosaic.version = 11 : i64} {
  func.func @matmul_bn_prelu_kernel(%arg0: i32, %arg1: memref<128x72xbf16, #tpu.memory_space<vmem>>, %arg2: memref<72x128xbf16, #tpu.memory_space<vmem>>, %arg3: memref<1x128xf32, #tpu.memory_space<vmem>>, %arg4: memref<1x128xf32, #tpu.memory_space<vmem>>, %arg5: memref<1x128xf32, #tpu.memory_space<vmem>>, %arg6: memref<128x128xf32, #tpu.memory_space<vmem>>) attributes {dimension_semantics = [#tpu.dimension_semantics<parallel>], iteration_bounds = array<i64: 1>, scalar_prefetch = 0 : i64, scratch_operands = 0 : i64, tpu.core_type = #tpu.core_type<tc>, window_params = [{transform_indices = @transform_0, window_bounds = array<i64: 128, 72>}, {pipeline_mode = #tpu.pipeline_mode<synchronous>, transform_indices = @transform_1, window_bounds = array<i64: 72, 128>}, {pipeline_mode = #tpu.pipeline_mode<synchronous>, transform_indices = @transform_2, window_bounds = array<i64: 1, 128>}, {pipeline_mode = #tpu.pipeline_mode<synchronous>, transform_indices = @transform_3, window_bounds = array<i64: 1, 128>}, {pipeline_mode = #tpu.pipeline_mode<synchronous>, transform_indices = @transform_4, window_bounds = array<i64: 1, 128>}, {transform_indices = @transform_5, window_bounds = array<i64: 128, 128>}]} {
    %c0 = arith.constant 0 : index
    %c0_0 = arith.constant 0 : index
    %0 = vector.load %arg1[%c0, %c0_0] : memref<128x72xbf16, #tpu.memory_space<vmem>>, vector<128x72xbf16>
    %c0_1 = arith.constant 0 : index
    %c0_2 = arith.constant 0 : index
    %1 = vector.load %arg2[%c0_1, %c0_2] : memref<72x128xbf16, #tpu.memory_space<vmem>>, vector<72x128xbf16>
    %cst = arith.constant dense<0.000000e+00> : vector<128x128xf32>
    %2 = tpu.matmul %0, %1, %cst {dimension_numbers = #tpu.dot_dimension_numbers<[1], [0], [0], [1], [0, 0, 1, 1], [], []>} : vector<128x72xbf16>, vector<72x128xbf16>, vector<128x128xf32> -> vector<128x128xf32>
    %c0_3 = arith.constant 0 : index
    %c0_4 = arith.constant 0 : index
    %3 = vector.load %arg3[%c0_3, %c0_4] : memref<1x128xf32, #tpu.memory_space<vmem>>, vector<1x128xf32>
    %4 = vector.broadcast %3 : vector<1x128xf32> to vector<128x128xf32>
    %5 = arith.mulf %2, %4 : vector<128x128xf32>
    %c0_5 = arith.constant 0 : index
    %c0_6 = arith.constant 0 : index
    %6 = vector.load %arg4[%c0_5, %c0_6] : memref<1x128xf32, #tpu.memory_space<vmem>>, vector<1x128xf32>
    %7 = vector.broadcast %6 : vector<1x128xf32> to vector<128x128xf32>
    %8 = arith.addf %5, %7 : vector<128x128xf32>
    %cst_7 = arith.constant 0.000000e+00 : f32
    %9 = vector.broadcast %cst_7 : f32 to vector<128x128xf32>
    %10 = arith.cmpf ogt, %8, %9 : vector<128x128xf32>
    %c0_8 = arith.constant 0 : index
    %c0_9 = arith.constant 0 : index
    %11 = vector.load %arg5[%c0_8, %c0_9] : memref<1x128xf32, #tpu.memory_space<vmem>>, vector<1x128xf32>
    %12 = vector.broadcast %11 : vector<1x128xf32> to vector<128x128xf32>
    %13 = arith.mulf %12, %8 : vector<128x128xf32>
    %14 = arith.select %10, %8, %13 : vector<128x128xi1>, vector<128x128xf32>
    %c0_10 = arith.constant 0 : index
    %c0_11 = arith.constant 0 : index
    %15 = vector.load %arg6[%c0_10, %c0_11] : memref<128x128xf32, #tpu.memory_space<vmem>>, vector<128x128xf32>
    tpu.vector_store %arg6[%c0_10, %c0_11], %14 {strides = array<i32>} : memref<128x128xf32, #tpu.memory_space<vmem>>, vector<128x128xf32>,
    return
  }
  func.func @transform_0(%arg0: i32) -> (i32, i32) {
    %c0_i32 = arith.constant 0 : i32
    %c0_i32_0 = arith.constant 0 : i32
    return %arg0, %c0_i32 : i32, i32
  }
  func.func @transform_1(%arg0: i32) -> (i32, i32) {
    %c0_i32 = arith.constant 0 : i32
    %c0_i32_0 = arith.constant 0 : i32
    %c0_i32_1 = arith.constant 0 : i32
    return %c0_i32, %c0_i32_0 : i32, i32
  }
  func.func @transform_2(%arg0: i32) -> (i32, i32) {
    %c0_i32 = arith.constant 0 : i32
    %c0_i32_0 = arith.constant 0 : i32
    %c0_i32_1 = arith.constant 0 : i32
    return %c0_i32, %c0_i32_0 : i32, i32
  }
  func.func @transform_3(%arg0: i32) -> (i32, i32) {
    %c0_i32 = arith.constant 0 : i32
    %c0_i32_0 = arith.constant 0 : i32
    %c0_i32_1 = arith.constant 0 : i32
    return %c0_i32, %c0_i32_0 : i32, i32
  }
  func.func @transform_4(%arg0: i32) -> (i32, i32) {
    %c0_i32 = arith.constant 0 : i32
    %c0_i32_0 = arith.constant 0 : i32
    %c0_i32_1 = arith.constant 0 : i32
    return %c0_i32, %c0_i32_0 : i32, i32
  }
  func.func @transform_5(%arg0: i32) -> (i32, i32) {
    %c0_i32 = arith.constant 0 : i32
    %c0_i32_0 = arith.constant 0 : i32
    return %arg0, %c0_i32 : i32, i32
  }
}

</mosaic_0001>

<llo_original>
// kernel: tpu_custom_call.1
$region0: #{tpu_custom_call.1}
  #allocation0 [shape = 'u32[]', space=smem, size = 0x4, offset = 0x4, fixed_abs, tag = 'smem constant byte address 0x4 - core index']
  #allocation1 [shape = 'u32[144,128]{1,0:T(1,128)}', space=vmem, size = 0x12000, scoped, tag = 'internal scratch']
  %s0 = inlined_call_operand.vmem [shape: bf16[128,72], index: 0, kind: input, shape index: {}]
  %s1 = inlined_call_operand.vmem [shape: bf16[72,128], index: 1, kind: input, shape index: {}]
  %s2 = inlined_call_operand.vmem [shape: f32[1,128], index: 2, kind: input, shape index: {}]
  %s3 = inlined_call_operand.vmem [shape: f32[1,128], index: 3, kind: input, shape index: {}]
  %s4 = inlined_call_operand.vmem [shape: f32[1,128], index: 4, kind: input, shape index: {}]
  %s5 = inlined_call_operand.hbm [shape: f32[128,128], index: 5, kind: output, shape index: {}]
  %s6 = sld [smem:[#allocation0]]
  $region30: #{tpu_custom_call.1} parent=0
    _
  %s8 = ssub.s32 1, %s6
  %s9 = scalar_select 0, %s8, %s6
  $region1: #{tpu_custom_call.1} parent=0
    #allocation2 [shape = 'u8[65536]{0}', space=vmem, size = 0x10000, scoped, tag = 'output window, operand 0, single buffered']
    #allocation3 [shape = 's32[1]{0}', space=sflag, size = 0x4, scoped, tag = 'scoped memory for tpu_custom_call.1']
    %10 = vsyncpa [#allocation3], 0
    // Predicated region
    $region2: #{tpu_custom_call.1} parent=1 // pred_check
      _
    $region3: #{tpu_custom_call.1} parent=1 // pred_check_branch
      %12 = sbr.rel (0) target = $region5
    $region4: #{tpu_custom_call.1} parent=1 // pred_region
      _
    $region5: #{tpu_custom_call.1} parent=1 // pred_fallthru
      _
    // Predicated region
    $region6: #{tpu_custom_call.1} parent=1 // pred_check
      _
    $region7: #{tpu_custom_call.1} parent=1 // pred_check_branch
      %14 = sbr.rel (0) target = $region9
    $region8: #{tpu_custom_call.1} parent=1 // pred_region
      _
    $region9: #{tpu_custom_call.1} parent=1 // pred_fallthru
      _
    // Predicated region
    $region10: #{tpu_custom_call.1} parent=1 // pred_check
      _
    $region11: #{tpu_custom_call.1} parent=1 // pred_check_branch
      %16 = sbr.rel (0) target = $region13
    $region12: #{tpu_custom_call.1} parent=1 // pred_region
      _
    $region13: #{tpu_custom_call.1} parent=1 // pred_fallthru
      _
    // Predicated region
    $region14: #{tpu_custom_call.1} parent=1 // pred_check
      _
    $region15: #{tpu_custom_call.1} parent=1 // pred_check_branch
      %18 = sbr.rel (0) target = $region17
    $region16: #{tpu_custom_call.1} parent=1 // pred_region
      _
    $region17: #{tpu_custom_call.1} parent=1 // pred_fallthru
      _
    // Predicated region
    $region18: #{tpu_custom_call.1} parent=1 // pred_check
      _
    $region19: #{tpu_custom_call.1} parent=1 // pred_check_branch
      %20 = sbr.rel (0) target = $region21
    $region20: #{tpu_custom_call.1} parent=1 // pred_region
      _
    $region21: #{tpu_custom_call.1} parent=1 // pred_fallthru
      _
    %v22 = vld [vmem:[%s0] sm:$0xf]
    %v23 = vld [vmem:[%s0 + $0x4] sm:$0xf]
    %v24 = vld [vmem:[%s0 + $0x8] sm:$0xf]
    %v25 = vld [vmem:[%s0 + $0xc] sm:$0xf]
    %v26 = vld [vmem:[%s0 + $0x10] sm:$0xf]
    %v27 = vld [vmem:[%s0 + $0x14] sm:$0xf]
    %v28 = vld [vmem:[%s0 + $0x18] sm:$0xf]
    %v29 = vld [vmem:[%s0 + $0x1c] sm:$0xf]
    %v30 = vld [vmem:[%s0 + $0x20] sm:$0xf]
    %v31 = vld [vmem:[%s0 + $0x24] sm:$0xf]
    %v32 = vld [vmem:[%s0 + $0x28] sm:$0xf]
    %v33 = vld [vmem:[%s0 + $0x2c] sm:$0xf]
    %v34 = vld [vmem:[%s0 + $0x30] sm:$0xf]
    %v35 = vld [vmem:[%s0 + $0x34] sm:$0xf]
    %v36 = vld [vmem:[%s0 + $0x38] sm:$0xf]
    %v37 = vld [vmem:[%s0 + $0x3c] sm:$0xf]
    %v38 = vld [vmem:[%s1] sm:$0xf]
    %v39 = vld [vmem:[%s1 + $0x4] sm:$0xf]
    %v40 = vld [vmem:[%s1 + $0x8] sm:$0xf]
    %v41 = vld [vmem:[%s1 + $0xc] sm:$0xf]
    %v42 = vld [vmem:[%s1 + $0x10] sm:$0xf]
    %v43 = vld [vmem:[%s1 + $0x14] sm:$0xf]
    %v44 = vld [vmem:[%s1 + $0x18] sm:$0xf]
    %v45 = vld [vmem:[%s1 + $0x1c] sm:$0xf]
    %v46 = vld [vmem:[%s1 + $0x20] sm:$0xf]
    %v63 = vunpack.c.l.b16 %v22
    %v64 = vunpack.c.l.b16 %v23
    %v65 = vunpack.c.l.b16 %v24
    %v66 = vunpack.c.l.b16 %v25
    %v67 = vunpack.c.l.b16 %v26
    %v68 = vunpack.c.l.b16 %v27
    %v69 = vunpack.c.l.b16 %v28
    %v70 = vunpack.c.l.b16 %v29
    %v71 = vunpack.c.l.b16 %v30
    %v72 = vunpack.c.l.b16 %v31
    %v73 = vunpack.c.l.b16 %v32
    %v74 = vunpack.c.l.b16 %v33
    %v75 = vunpack.c.l.b16 %v34
    %v76 = vunpack.c.l.b16 %v35
    %v77 = vunpack.c.l.b16 %v36
    %v78 = vunpack.c.l.b16 %v37
    %v79 = vpack.c.b16 %v64, %v63
    %v80 = vpack.c.b16 %v66, %v65
    %v81 = vpack.c.b16 %v68, %v67
    %v82 = vpack.c.b16 %v70, %v69
    %v83 = vpack.c.b16 %v72, %v71
    %v84 = vpack.c.b16 %v74, %v73
    %v85 = vpack.c.b16 %v76, %v75
    %v86 = vpack.c.b16 %v78, %v77
    %v96 = vunpack.c.l.b16 %v38
    %v97 = vunpack.c.l.b16 %v39
    %v98 = vunpack.c.l.b16 %v40
    %v99 = vunpack.c.l.b16 %v41
    %v100 = vunpack.c.l.b16 %v42
    %v101 = vunpack.c.l.b16 %v43
    %v102 = vunpack.c.l.b16 %v44
    %v103 = vunpack.c.l.b16 %v45
    %v104 = vunpack.c.l.b16 %v46
    %v105 = vpack.c.b16 %v97, %v96
    %v106 = vpack.c.b16 %v99, %v98
    %v107 = vpack.c.b16 %v101, %v100
    %v108 = vpack.c.b16 %v103, %v102
    %v109 = vpack.c.b16 %v104, %v104
    %vm114 = vcmask 588800
    %v116 = vsel %vm114, %v79, 0
    %v119 = vsel %vm114, %v80, 0
    %v122 = vsel %vm114, %v81, 0
    %v125 = vsel %vm114, %v82, 0
    %v128 = vsel %vm114, %v83, 0
    %v131 = vsel %vm114, %v84, 0
    %v134 = vsel %vm114, %v85, 0
    %v137 = vsel %vm114, %v86, 0
    %vm139 = vcmask 1043456
    %v141 = vsel %vm139, %v109, 0
    %143 = vmatprep.subr.bf16.mxu0 0
    %144 = vmatpush1.bf16.msra.mxu0 %v105
    %145 = vmatprep.subr.bf16.mxu0 0
    %146 = vmatpush1.bf16.msra.mxu0 %v106
    %147 = vmatprep.subr.bf16.mxu0 0
    %148 = vmatpush1.bf16.msra.mxu0 %v107
    %149 = vmatprep.subr.bf16.mxu0 0
    %150 = vmatpush1.bf16.msra.mxu0 %v108
    %151 = vmatprep.subr.bf16.mxu0 0
    %152 = vmatpush1.bf16.msra.mxu0 %v141
    %153 = vmatprep.subr.bf16.mxu0 0
    %154 = vmatpush1.bf16.msra.mxu0 0
    %155 = vmatprep.subr.bf16.mxu0 0
    %156 = vmatpush1.bf16.msra.mxu0 0
    %157 = vmatprep.subr.bf16.mxu0 0
    %158 = vmatpush1.bf16.msra.mxu0 0
    %159 = vmatprep.subr.bf16.mxu0 0
    %160 = vmatpush1.bf16.msra.mxu0 0
    %161 = vmatprep.subr.bf16.mxu0 0
    %162 = vmatpush1.bf16.msra.mxu0 0
    %163 = vmatprep.subr.bf16.mxu0 0
    %164 = vmatpush1.bf16.msra.mxu0 0
    %165 = vmatprep.subr.bf16.mxu0 0
    %166 = vmatpush1.bf16.msra.mxu0 0
    %167 = vmatprep.subr.bf16.mxu0 0
    %168 = vmatpush1.bf16.msra.mxu0 0
    %169 = vmatprep.subr.bf16.mxu0 0
    %170 = vmatpush1.bf16.msra.mxu0 0
    %171 = vmatprep.subr.bf16.mxu0 0
    %172 = vmatpush1.bf16.msra.mxu0 0
    %173 = vmatprep.subr.bf16.mxu0 0
    %174 = vmatpush1.bf16.msra.mxu0 0
    %175 = vmatprep.mubr.bf16.mxu0 0
    %176 = vmatmul.mubr.bf16.gmra.mrb[0].mxu0 %v116
    %v177 = vpop.f32.mrb[0].mxu0
    %v178 = vadd.f32 0.0, %v177
    %v179 = vpop.f32.mrb[0].mxu0
    %v180 = vpop.f32.mrb[0].mxu0
    %v181 = vadd.f32 0.0, %v180
    %v182 = vpop.f32.mrb[0].mxu0
    %183 = vmatprep.mubr.bf16.mxu0 0
    %184 = vmatmul.mubr.bf16.gmra.mrb[0].mxu0 %v119
    %v185 = vpop.f32.mrb[0].mxu0
    %v186 = vadd.f32 0.0, %v185
    %v187 = vpop.f32.mrb[0].mxu0
    %v188 = vpop.f32.mrb[0].mxu0
    %v189 = vadd.f32 0.0, %v188
    %v190 = vpop.f32.mrb[0].mxu0
    %191 = vmatprep.mubr.bf16.mxu0 0
    %192 = vmatmul.mubr.bf16.gmra.mrb[0].mxu0 %v122
    %v193 = vpop.f32.mrb[0].mxu0
    %v194 = vadd.f32 0.0, %v193
    %v195 = vpop.f32.mrb[0].mxu0
    %v196 = vpop.f32.mrb[0].mxu0
    %v197 = vadd.f32 0.0, %v196
    %v198 = vpop.f32.mrb[0].mxu0
    %199 = vmatprep.mubr.bf16.mxu0 0
    %200 = vmatmul.mubr.bf16.gmra.mrb[0].mxu0 %v125
    %v201 = vpop.f32.mrb[0].mxu0
    %v202 = vadd.f32 0.0, %v201
    %v203 = vpop.f32.mrb[0].mxu0
    %v204 = vpop.f32.mrb[0].mxu0
    %v205 = vadd.f32 0.0, %v204
    %v206 = vpop.f32.mrb[0].mxu0
    %207 = vmatprep.mubr.bf16.mxu0 0
    %208 = vmatmul.mubr.bf16.gmra.mrb[0].mxu0 %v128
    %v209 = vpop.f32.mrb[0].mxu0
    %v210 = vadd.f32 0.0, %v209
    %v211 = vpop.f32.mrb[0].mxu0
    %v212 = vpop.f32.mrb[0].mxu0
    %v213 = vadd.f32 0.0, %v212
    %v214 = vpop.f32.mrb[0].mxu0
    %215 = vmatprep.mubr.bf16.mxu0 0
    %216 = vmatmul.mubr.bf16.gmra.mrb[0].mxu0 %v131
    %v217 = vpop.f32.mrb[0].mxu0
    %v218 = vadd.f32 0.0, %v217
    %v219 = vpop.f32.mrb[0].mxu0
    %v220 = vpop.f32.mrb[0].mxu0
    %v221 = vadd.f32 0.0, %v220
    %v222 = vpop.f32.mrb[0].mxu0
    %223 = vmatprep.mubr.bf16.mxu0 0
    %224 = vmatmul.mubr.bf16.gmra.mrb[0].mxu0 %v134
    %v225 = vpop.f32.mrb[0].mxu0
    %v226 = vadd.f32 0.0, %v225
    %v227 = vpop.f32.mrb[0].mxu0
    %v228 = vpop.f32.mrb[0].mxu0
    %v229 = vadd.f32 0.0, %v228
    %v230 = vpop.f32.mrb[0].mxu0
    %231 = vmatprep.mubr.bf16.mxu0 0
    %232 = vmatmul.mubr.bf16.gmra.mrb[0].mxu0 %v137
    %v233 = vpop.f32.mrb[0].mxu0
    %v234 = vadd.f32 0.0, %v233
    %v235 = vpop.f32.mrb[0].mxu0
    %v236 = vpop.f32.mrb[0].mxu0
    %v237 = vadd.f32 0.0, %v236
    %v238 = vpop.f32.mrb[0].mxu0
    %239 = vdwg.mxu0
    %v240 = vld [vmem:[%s2] sm:$0x1]
    %v242 = vlaneseq
    %v243 = vshrl.u32 %v242, 7
    %v244 = vsub.s32 0, %v243
    %v245 = vrot.slane %v240, %v244
    %v247 = vmul.f32 %v178, %v245
    %v248 = vmul.f32 %v181, %v245
    %v249 = vmul.f32 %v186, %v245
    %v250 = vmul.f32 %v189, %v245
    %v251 = vmul.f32 %v194, %v245
    %v252 = vmul.f32 %v197, %v245
    %v253 = vmul.f32 %v202, %v245
    %v254 = vmul.f32 %v205, %v245
    %v255 = vmul.f32 %v210, %v245
    %v256 = vmul.f32 %v213, %v245
    %v257 = vmul.f32 %v218, %v245
    %v258 = vmul.f32 %v221, %v245
    %v259 = vmul.f32 %v226, %v245
    %v260 = vmul.f32 %v229, %v245
    %v261 = vmul.f32 %v234, %v245
    %v262 = vmul.f32 %v237, %v245
    %v263 = vld [vmem:[%s3] sm:$0x1]
    %v265 = vlaneseq
    %v266 = vshrl.u32 %v265, 7
    %v267 = vsub.s32 0, %v266
    %v268 = vrot.slane %v263, %v267
    %v270 = vadd.f32 %v247, %v268
    %v271 = vadd.f32 %v248, %v268
    %v272 = vadd.f32 %v249, %v268
    %v273 = vadd.f32 %v250, %v268
    %v274 = vadd.f32 %v251, %v268
    %v275 = vadd.f32 %v252, %v268
    %v276 = vadd.f32 %v253, %v268
    %v277 = vadd.f32 %v254, %v268
    %v278 = vadd.f32 %v255, %v268
    %v279 = vadd.f32 %v256, %v268
    %v280 = vadd.f32 %v257, %v268
    %v281 = vadd.f32 %v258, %v268
    %v282 = vadd.f32 %v259, %v268
    %v283 = vadd.f32 %v260, %v268
    %v284 = vadd.f32 %v261, %v268
    %v285 = vadd.f32 %v262, %v268
    %vm286 = vcmp.gt.f32.partialorder %v270, 0.0
    %vm287 = vcmp.gt.f32.partialorder %v271, 0.0
    %vm288 = vcmp.gt.f32.partialorder %v272, 0.0
    %vm289 = vcmp.gt.f32.partialorder %v273, 0.0
    %vm290 = vcmp.gt.f32.partialorder %v274, 0.0
    %vm291 = vcmp.gt.f32.partialorder %v275, 0.0
    %vm292 = vcmp.gt.f32.partialorder %v276, 0.0
    %vm293 = vcmp.gt.f32.partialorder %v277, 0.0
    %vm294 = vcmp.gt.f32.partialorder %v278, 0.0
    %vm295 = vcmp.gt.f32.partialorder %v279, 0.0
    %vm296 = vcmp.gt.f32.partialorder %v280, 0.0
    %vm297 = vcmp.gt.f32.partialorder %v281, 0.0
    %vm298 = vcmp.gt.f32.partialorder %v282, 0.0
    %vm299 = vcmp.gt.f32.partialorder %v283, 0.0
    %vm300 = vcmp.gt.f32.partialorder %v284, 0.0
    %vm301 = vcmp.gt.f32.partialorder %v285, 0.0
    %v302 = vld [vmem:[%s4] sm:$0x1]
    %v304 = vlaneseq
    %v305 = vshrl.u32 %v304, 7
    %v306 = vsub.s32 0, %v305
    %v307 = vrot.slane %v302, %v306
    %v309 = vmul.f32 %v307, %v270
    %v310 = vmul.f32 %v307, %v271
    %v311 = vmul.f32 %v307, %v272
    %v312 = vmul.f32 %v307, %v273
    %v313 = vmul.f32 %v307, %v274
    %v314 = vmul.f32 %v307, %v275
    %v315 = vmul.f32 %v307, %v276
    %v316 = vmul.f32 %v307, %v277
    %v317 = vmul.f32 %v307, %v278
    %v318 = vmul.f32 %v307, %v279
    %v319 = vmul.f32 %v307, %v280
    %v320 = vmul.f32 %v307, %v281
    %v321 = vmul.f32 %v307, %v282
    %v322 = vmul.f32 %v307, %v283
    %v323 = vmul.f32 %v307, %v284
    %v324 = vmul.f32 %v307, %v285
    %v325 = vsel %vm286, %v270, %v309
    %v326 = vsel %vm287, %v271, %v310
    %v327 = vsel %vm288, %v272, %v311
    %v328 = vsel %vm289, %v273, %v312
    %v329 = vsel %vm290, %v274, %v313
    %v330 = vsel %vm291, %v275, %v314
    %v331 = vsel %vm292, %v276, %v315
    %v332 = vsel %vm293, %v277, %v316
    %v333 = vsel %vm294, %v278, %v317
    %v334 = vsel %vm295, %v279, %v318
    %v335 = vsel %vm296, %v280, %v319
    %v336 = vsel %vm297, %v281, %v320
    %v337 = vsel %vm298, %v282, %v321
    %v338 = vsel %vm299, %v283, %v322
    %v339 = vsel %vm300, %v284, %v323
    %v340 = vsel %vm301, %v285, %v324
    %341 = vst [vmem:[#allocation2] sm:$0xff] %v325
    %342 = vst [vmem:[#allocation2 + $0x8] sm:$0xff] %v326
    %343 = vst [vmem:[#allocation2 + $0x10] sm:$0xff] %v327
    %344 = vst [vmem:[#allocation2 + $0x18] sm:$0xff] %v328
    %345 = vst [vmem:[#allocation2 + $0x20] sm:$0xff] %v329
    %346 = vst [vmem:[#allocation2 + $0x28] sm:$0xff] %v330
    %347 = vst [vmem:[#allocation2 + $0x30] sm:$0xff] %v331
    %348 = vst [vmem:[#allocation2 + $0x38] sm:$0xff] %v332
    %349 = vst [vmem:[#allocation2 + $0x40] sm:$0xff] %v333
    %350 = vst [vmem:[#allocation2 + $0x48] sm:$0xff] %v334
    %351 = vst [vmem:[#allocation2 + $0x50] sm:$0xff] %v335
    %352 = vst [vmem:[#allocation2 + $0x58] sm:$0xff] %v336
    %353 = vst [vmem:[#allocation2 + $0x60] sm:$0xff] %v337
    %354 = vst [vmem:[#allocation2 + $0x68] sm:$0xff] %v338
    %355 = vst [vmem:[#allocation2 + $0x70] sm:$0xff] %v339
    %356 = vst [vmem:[#allocation2 + $0x78] sm:$0xff] %v340
    // Predicated region
    $region22: #{tpu_custom_call.1} parent=1 // pred_check
      _
    $region23: #{tpu_custom_call.1} parent=1 // pred_check_branch
      %358 = sbr.rel (0) target = $region25
    $region24: #{tpu_custom_call.1} parent=1 // pred_region
      %s360 = ssub.s32 2048, 2048
      %361 = vsyncadd [#allocation3], %s360
      %s362 = sshll.u32 [#allocation2], 4
      %s363 = int_to_ptr.vmem [resolvable:$true] %s362
      %368 = dma.vmem_to_hbm [thread:$0]  %s363, 2048, %s5, [#allocation3], 128, 128, 8
    $region25: #{tpu_custom_call.1} parent=1 // pred_fallthru
      _
    // Predicated region
    $region26: #{tpu_custom_call.1} parent=1 // pred_check
      _
    $region27: #{tpu_custom_call.1} parent=1 // pred_check_branch
      %370 = sbr.rel (0) target = $region29
    $region28: #{tpu_custom_call.1} parent=1 // pred_region
      %371 = dma.done [#allocation3], 2048
    $region29: #{tpu_custom_call.1} parent=1 // pred_fallthru
      _
    %372 = vsyncpa [#allocation3], 1

</llo_original>
